<compile_context>
chip_gen: v5e
topology: v5e:2x2
jax: 0.10.0
libtpu: 0.0.40
codegen_flags: <defaults>
</compile_context>

<pallas_src>
import functools

import jax
import jax.numpy as jnp
from jax.experimental import pallas as pl
from jax.experimental.pallas import tpu as pltpu

OBS_DIM = 32      # stand-in for config.OBS_DIM_DEFENSE_MODEL
HIDDEN = 64
HIDDEN_PAD = 128  # hidden padded to one full lane width
LANES = 128
DEFAULT_TILE_B = 1024
BATCH = 8


def defense_mlp_kernel(x_ref, w1_ref, b1_ref, w2_ref, b2_ref, o_ref):
    # Linear(obs_dim, 128): MXU matmul with f32 accumulate.
    h = jnp.dot(x_ref[...], w1_ref[...], preferred_element_type=jnp.float32)
    # Bias + ReLU on the VPU.
    h = jnp.maximum(h + b1_ref[...], 0.0)
    # Linear(128, 1): N=1, so do VPU mul + lane reduction instead of an MXU
    # round-trip.  w2 is stored as a (1, 128) row; b2 is an SMEM scalar.
    z = jnp.sum(h * w2_ref[...], axis=-1, keepdims=True) + b2_ref[0, 0]
    # Sigmoid: exp on the EUP, approximate reciprocal also on the EUP.
    p = pl.reciprocal(1.0 + jnp.exp(-z), approx=True)
    # Lane-dense store: broadcast (tile_b, 1) across the 128-lane output slab.
    o_ref[...] = jnp.broadcast_to(p, o_ref.shape)


def _round_up(n, m):
    return ((n + m - 1) // m) * m


@functools.partial(jax.jit, static_argnames=("tile_b",))
def defense_model_forward(x, w1, b1, w2, b2, *, tile_b=DEFAULT_TILE_B):
    """x: (B, OBS_DIM) f32; w1: (OBS_DIM, 64); b1: (1, 64); w2: (64, 1);
    b2: (1, 1).  Returns (B, 1) f32 probabilities."""
    B, obs_dim = x.shape
    hidden = w1.shape[1]

    # Zero-pad hidden 64 -> 128 (exact: ReLU(0)=0 and padded w2 rows are 0).
    w1p = jnp.zeros((obs_dim, HIDDEN_PAD), jnp.float32).at[:, :hidden].set(w1)
    b1p = jnp.zeros((1, HIDDEN_PAD), jnp.float32).at[:, :hidden].set(
        b1.reshape(1, hidden))
    # Second-layer weight as a (1, 128) row for the VPU-mul / lane-reduce path.
    w2p = jnp.zeros((1, HIDDEN_PAD), jnp.float32).at[:, :hidden].set(
        w2.reshape(1, hidden))
    b2p = b2.reshape(1, 1).astype(jnp.float32)

    # Batch tiling: sublane-aligned tile, padded batch to a tile multiple.
    tb = min(tile_b, _round_up(max(B, 8), 8))
    b_pad = _round_up(B, tb)
    x_pad = x if b_pad == B else jnp.pad(x, ((0, b_pad - B), (0, 0)))

    out = pl.pallas_call(
        defense_mlp_kernel,
        out_shape=jax.ShapeDtypeStruct((b_pad, LANES), jnp.float32),
        grid=(b_pad // tb,),
        in_specs=[
            pl.BlockSpec((tb, obs_dim), lambda i: (i, 0)),          # x tile
            pl.BlockSpec((obs_dim, HIDDEN_PAD), lambda i: (0, 0)),  # w1 (resident)
            pl.BlockSpec((1, HIDDEN_PAD), lambda i: (0, 0)),        # b1
            pl.BlockSpec((1, HIDDEN_PAD), lambda i: (0, 0)),        # w2 row
            pl.BlockSpec(memory_space=pltpu.MemorySpace.SMEM),      # b2 scalar
        ],
        out_specs=pl.BlockSpec((tb, LANES), lambda i: (i, 0)),
        compiler_params=pltpu.CompilerParams(
            dimension_semantics=("parallel",)),  # megacore split on v7x
    )(x_pad, w1p, b1p, w2p, b2p)

    # Only column 0 of the lane-dense slab is meaningful.
    return out[:B, :1]
    # TODO(synk): for very large serving batches on v6e/v7x, cast x/w1 to bf16
    # for the first matmul (keep f32 accumulate) for 2x MXU throughput.


def init_params(key):
    # Mimics nn.Linear's uniform(-1/sqrt(fan_in), 1/sqrt(fan_in)) init.
    k1, k2, k3, k4 = jax.random.split(key, 4)
    lim1 = 1.0 / jnp.sqrt(jnp.float32(OBS_DIM))
    lim2 = 1.0 / jnp.sqrt(jnp.float32(HIDDEN))
    w1 = jax.random.uniform(k1, (OBS_DIM, HIDDEN), jnp.float32, -lim1, lim1)
    b1 = jax.random.uniform(k2, (1, HIDDEN), jnp.float32, -lim1, lim1)
    w2 = jax.random.uniform(k3, (HIDDEN, 1), jnp.float32, -lim2, lim2)
    b2 = jax.random.uniform(k4, (1, 1), jnp.float32, -lim2, lim2)
    return w1, b1, w2, b2


if __name__ == "__main__":
    key = jax.random.PRNGKey(0)
    kx, kp = jax.random.split(key)
    x = jax.random.normal(kx, (BATCH, OBS_DIM), jnp.float32)
    w1, b1, w2, b2 = init_params(kp)

    out = defense_model_forward(x, w1, b1, w2, b2)
    out = jax.block_until_ready(out)

    # Reference check in plain JAX (same math as the PyTorch module).
    ref = jax.nn.sigmoid(jnp.maximum(x @ w1 + b1, 0.0) @ w2 + b2)
    assert out.shape == (BATCH, 1)
    # approx reciprocal in the sigmoid -> slightly looser tolerance.
    assert jnp.allclose(out, ref, atol=2e-3, rtol=2e-3), "mismatch vs reference"

    print("KERNEL_OK")
</pallas_src>

<mosaic_0001>
module attributes {stable_mosaic.version = 11 : i64} {
  func.func @defense_mlp_kernel(%arg0: i32, %arg1: memref<8x32xf32, #tpu.memory_space<vmem>>, %arg2: memref<32x128xf32, #tpu.memory_space<vmem>>, %arg3: memref<1x128xf32, #tpu.memory_space<vmem>>, %arg4: memref<1x128xf32, #tpu.memory_space<vmem>>, %arg5: memref<1x1xf32, #tpu.memory_space<smem>>, %arg6: memref<8x128xf32, #tpu.memory_space<vmem>>) attributes {dimension_semantics = [#tpu.dimension_semantics<parallel>], iteration_bounds = array<i64: 1>, scalar_prefetch = 0 : i64, scratch_operands = 0 : i64, tpu.core_type = #tpu.core_type<tc>, window_params = [{transform_indices = @transform_0, window_bounds = array<i64: 8, 32>}, {pipeline_mode = #tpu.pipeline_mode<synchronous>, transform_indices = @transform_1, window_bounds = array<i64: 32, 128>}, {pipeline_mode = #tpu.pipeline_mode<synchronous>, transform_indices = @transform_2, window_bounds = array<i64: 1, 128>}, {pipeline_mode = #tpu.pipeline_mode<synchronous>, transform_indices = @transform_3, window_bounds = array<i64: 1, 128>}, {transform_indices = @transform_4, window_bounds = array<i64: 1, 1>}, {transform_indices = @transform_5, window_bounds = array<i64: 8, 128>}]} {
    %c0 = arith.constant 0 : index
    %c0_0 = arith.constant 0 : index
    %0 = vector.load %arg1[%c0, %c0_0] : memref<8x32xf32, #tpu.memory_space<vmem>>, vector<8x32xf32>
    %c0_1 = arith.constant 0 : index
    %c0_2 = arith.constant 0 : index
    %1 = vector.load %arg2[%c0_1, %c0_2] : memref<32x128xf32, #tpu.memory_space<vmem>>, vector<32x128xf32>
    %cst = arith.constant dense<0.000000e+00> : vector<8x128xf32>
    %2 = tpu.matmul %0, %1, %cst {dimension_numbers = #tpu.dot_dimension_numbers<[1], [0], [0], [1], [0, 0, 1, 1], [], []>} : vector<8x32xf32>, vector<32x128xf32>, vector<8x128xf32> -> vector<8x128xf32>
    %c0_3 = arith.constant 0 : index
    %c0_4 = arith.constant 0 : index
    %3 = vector.load %arg3[%c0_3, %c0_4] : memref<1x128xf32, #tpu.memory_space<vmem>>, vector<1x128xf32>
    %4 = vector.broadcast %3 : vector<1x128xf32> to vector<8x128xf32>
    %5 = arith.addf %2, %4 : vector<8x128xf32>
    %cst_5 = arith.constant 0.000000e+00 : f32
    %6 = vector.broadcast %cst_5 : f32 to vector<8x128xf32>
    %7 = arith.maximumf %5, %6 : vector<8x128xf32>
    %c0_6 = arith.constant 0 : index
    %c0_7 = arith.constant 0 : index
    %8 = vector.load %arg4[%c0_6, %c0_7] : memref<1x128xf32, #tpu.memory_space<vmem>>, vector<1x128xf32>
    %9 = vector.broadcast %8 : vector<1x128xf32> to vector<8x128xf32>
    %10 = arith.mulf %7, %9 : vector<8x128xf32>
    %cst_8 = arith.constant dense<0.000000e+00> : vector<8xf32>
    %11 = vector.multi_reduction <add>, %10, %cst_8 [1] : vector<8x128xf32> to vector<8xf32>
    %12 = vector.shape_cast %11 : vector<8xf32> to vector<8x1xf32>
    %c0_9 = arith.constant 0 : index
    %c0_10 = arith.constant 0 : index
    %13 = memref.load %arg5[%c0_9, %c0_10] : memref<1x1xf32, #tpu.memory_space<smem>>
    %14 = vector.broadcast %13 : f32 to vector<8x1xf32>
    %15 = arith.addf %12, %14 : vector<8x1xf32>
    %cst_11 = arith.constant 0.000000e+00 : f32
    %16 = vector.broadcast %cst_11 : f32 to vector<8x1xf32>
    %17 = arith.subf %16, %15 : vector<8x1xf32>
    %18 = math.exp %17 : vector<8x1xf32>
    %cst_12 = arith.constant 1.000000e+00 : f32
    %19 = vector.broadcast %cst_12 : f32 to vector<8x1xf32>
    %20 = arith.addf %19, %18 : vector<8x1xf32>
    %21 = tpu.reciprocal %20 {approx = true} : vector<8x1xf32> -> vector<8x1xf32>
    %22 = vector.shape_cast %21 : vector<8x1xf32> to vector<8x1xf32>
    %23 = vector.broadcast %22 : vector<8x1xf32> to vector<8x128xf32>
    %c0_13 = arith.constant 0 : index
    %c0_14 = arith.constant 0 : index
    %24 = vector.load %arg6[%c0_13, %c0_14] : memref<8x128xf32, #tpu.memory_space<vmem>>, vector<8x128xf32>
    tpu.vector_store %arg6[%c0_13, %c0_14], %23 {strides = array<i32>} : memref<8x128xf32, #tpu.memory_space<vmem>>, vector<8x128xf32>,
    return
  }
  func.func @transform_0(%arg0: i32) -> (i32, i32) {
    %c0_i32 = arith.constant 0 : i32
    %c0_i32_0 = arith.constant 0 : i32
    return %arg0, %c0_i32 : i32, i32
  }
  func.func @transform_1(%arg0: i32) -> (i32, i32) {
    %c0_i32 = arith.constant 0 : i32
    %c0_i32_0 = arith.constant 0 : i32
    %c0_i32_1 = arith.constant 0 : i32
    return %c0_i32, %c0_i32_0 : i32, i32
  }
  func.func @transform_2(%arg0: i32) -> (i32, i32) {
    %c0_i32 = arith.constant 0 : i32
    %c0_i32_0 = arith.constant 0 : i32
    %c0_i32_1 = arith.constant 0 : i32
    return %c0_i32, %c0_i32_0 : i32, i32
  }
  func.func @transform_3(%arg0: i32) -> (i32, i32) {
    %c0_i32 = arith.constant 0 : i32
    %c0_i32_0 = arith.constant 0 : i32
    %c0_i32_1 = arith.constant 0 : i32
    return %c0_i32, %c0_i32_0 : i32, i32
  }
  func.func @transform_4(%arg0: i32) -> (i32, i32) {
    %c0_i32 = arith.constant 0 : i32
    %c0_i32_0 = arith.constant 0 : i32
    %c0_i32_1 = arith.constant 0 : i32
    return %c0_i32, %c0_i32_0 : i32, i32
  }
  func.func @transform_5(%arg0: i32) -> (i32, i32) {
    %c0_i32 = arith.constant 0 : i32
    %c0_i32_0 = arith.constant 0 : i32
    return %arg0, %c0_i32 : i32, i32
  }
}

</mosaic_0001>

<llo_original>
// kernel: defense_model_forward.1
$region0: #{defense_model_forward.1}
  #allocation0 [shape = 'u32[]', space=smem, size = 0x4, offset = 0x4, fixed_abs, tag = 'smem constant byte address 0x4 - core index']
  #allocation1 [shape = 'u32[72,128]{1,0:T(1,128)}', space=vmem, size = 0x9000, scoped, tag = 'internal scratch']
  #allocation2 [shape = 'f32[1,1]{1,0:T(1,128)S(6)}', space=smem, size = 0x200, scoped, tag = 'scoped memory for defense_model_forward.1']
  %s0 = inlined_call_operand.vmem [shape: f32[8,32], index: 0, kind: input, shape index: {}]
  %s1 = inlined_call_operand.vmem [shape: f32[32,128], index: 1, kind: input, shape index: {}]
  %s2 = inlined_call_operand.vmem [shape: f32[1,128], index: 2, kind: input, shape index: {}]
  %s3 = inlined_call_operand.vmem [shape: f32[1,128], index: 3, kind: input, shape index: {}]
  %s4 = inlined_call_operand.<no memory space> [shape: f32[1,1], index: 4, kind: input, shape index: {}]
  %s5 = inlined_call_operand.vmem [shape: f32[8,128], index: 5, kind: output, shape index: {}]
  %s6 = sld [smem:[#allocation0]]
  $region30: #{defense_model_forward.1} parent=0
    _
  %s8 = ssub.s32 1, %s6
  %s9 = scalar_select 0, %s8, %s6
  %10 = sst [smem:[#allocation2]] %s4
  // Predicated region
  $region2: #{defense_model_forward.1} parent=0 // pred_check
    _
  $region3: #{defense_model_forward.1} parent=0 // pred_check_branch
    %12 = sbr.rel (0) target = $region5
  $region4: #{defense_model_forward.1} parent=0 // pred_region
    _
  $region5: #{defense_model_forward.1} parent=0 // pred_fallthru
    _
  // Predicated region
  $region6: #{defense_model_forward.1} parent=0 // pred_check
    _
  $region7: #{defense_model_forward.1} parent=0 // pred_check_branch
    %14 = sbr.rel (0) target = $region9
  $region8: #{defense_model_forward.1} parent=0 // pred_region
    _
  $region9: #{defense_model_forward.1} parent=0 // pred_fallthru
    _
  // Predicated region
  $region10: #{defense_model_forward.1} parent=0 // pred_check
    _
  $region11: #{defense_model_forward.1} parent=0 // pred_check_branch
    %16 = sbr.rel (0) target = $region13
  $region12: #{defense_model_forward.1} parent=0 // pred_region
    _
  $region13: #{defense_model_forward.1} parent=0 // pred_fallthru
    _
  // Predicated region
  $region14: #{defense_model_forward.1} parent=0 // pred_check
    _
  $region15: #{defense_model_forward.1} parent=0 // pred_check_branch
    %18 = sbr.rel (0) target = $region17
  $region16: #{defense_model_forward.1} parent=0 // pred_region
    _
  $region17: #{defense_model_forward.1} parent=0 // pred_fallthru
    _
  // Predicated region
  $region18: #{defense_model_forward.1} parent=0 // pred_check
    _
  $region19: #{defense_model_forward.1} parent=0 // pred_check_branch
    %20 = sbr.rel (0) target = $region21
  $region20: #{defense_model_forward.1} parent=0 // pred_region
    _
  $region21: #{defense_model_forward.1} parent=0 // pred_fallthru
    _
  %v21 = vld [vmem:[%s0] sm:$0xff]
  %v22 = vld [vmem:[%s1] sm:$0xff]
  %v23 = vld [vmem:[%s1 + $0x8] sm:$0xff]
  %v24 = vld [vmem:[%s1 + $0x10] sm:$0xff]
  %v25 = vld [vmem:[%s1 + $0x18] sm:$0xff]
  %v26 = vld [vmem:[%s2] sm:$0x1]
  %v28 = vperm.slane %v26, 0
  %vm30 = vcmask 261120
  %v32 = vsel %vm30, %v21, 0
  %34 = vmatpush.msra.mxu0 0.0
  %35 = vmatpush.msra.mxu0 0.0
  %36 = vmatpush.msra.mxu0 0.0
  %37 = vmatpush.msra.mxu0 0.0
  %38 = vmatpush.msra.mxu0 0.0
  %39 = vmatpush.msra.mxu0 0.0
  %40 = vmatpush.msra.mxu0 0.0
  %41 = vmatpush.msra.mxu0 0.0
  %42 = vmatpush.msra.mxu0 0.0
  %43 = vmatpush.msra.mxu0 0.0
  %44 = vmatpush.msra.mxu0 0.0
  %45 = vmatpush.msra.mxu0 0.0
  %46 = vmatpush.msra.mxu0 %v25
  %47 = vmatpush.msra.mxu0 %v24
  %48 = vmatpush.msra.mxu0 %v23
  %49 = vmatpush.msra.mxu0 %v22
  %50 = vmatmul.f32.gmra.mxu0 %v32
  %v51 = vpop.f32.mrf.mxu0
  %v52 = vadd.f32 %v28, %v51
  %53 = vdwg.mxu0
  %v54 = vmax.f32 %v52, 0.0
  %v55 = vld [vmem:[%s3] sm:$0x1]
  %v57 = vperm.slane %v55, 0
  %v59 = vmul.f32 %v54, %v57
  %60 = vadd.xlane.f32.xlu0 %v59
  %v61 = vpop.xlane.xlu0 %60
  %s62 = sld [smem:[#allocation2]]
  %v63 = vstv %s62
  %v64 = vadd.f32 %v61, %v63
  %v65 = vsub.f32 0.0, %v64
  %v66 = vmul.f32 %v65, 1.442695
  %v67 = vpow.pop %v66
  %v68 = vadd.f32 %v67, 1.0
  %v69 = vrcp.pop %v68
  %70 = vst [vmem:[%s5] sm:$0xff] %v69
  // Predicated region
  $region22: #{defense_model_forward.1} parent=0 // pred_check
    _
  $region23: #{defense_model_forward.1} parent=0 // pred_check_branch
    %72 = sbr.rel (0) target = $region25
  $region24: #{defense_model_forward.1} parent=0 // pred_region
    _
  $region25: #{defense_model_forward.1} parent=0 // pred_fallthru
    _
  // Predicated region
  $region26: #{defense_model_forward.1} parent=0 // pred_check
    _
  $region27: #{defense_model_forward.1} parent=0 // pred_check_branch
    %74 = sbr.rel (0) target = $region29
  $region28: #{defense_model_forward.1} parent=0 // pred_region
    _
  $region29: #{defense_model_forward.1} parent=0 // pred_fallthru
    _

</llo_original>
